<compile_context>
chip_gen: v7x
topology: tpu7x:2x2x1
jax: 0.10.0
libtpu: 0.0.40
codegen_flags: <defaults>
</compile_context>

<pallas_src>
import functools

import jax
import jax.numpy as jnp
from jax.experimental import pallas as pl
from jax.experimental.pallas import tpu as pltpu


NSPLIT = 2                      # leading "parallel" grid axis (both TCs on v7x)
_LANES = 128
_SLAB = 8 * _LANES              # elements in one (8,128) slab
_PER_BLOCK_BYTES = 2 << 20      # ~2 MiB per input block
_VMEM_LIMIT = 32 * 1024 * 1024  # explicit scoped VMEM limit (safe on v5e/v6e/v7x)


def _cdiv(a, b):
    return -(-a // b)


def _round_up(x, m):
    return _cdiv(x, m) * m


# --------------------------------------------------------------------------
# Kernels
# --------------------------------------------------------------------------
def _flat_sum_kernel(*refs, n_inputs):
    """No-softmax path. Blocks are (tile_slabs, 8, 128); acc is (8,128) lane partials."""
    in_refs = refs[:n_inputs]
    out_ref = refs[n_inputs]
    acc_ref = refs[n_inputs + 1]

    @pl.when(pl.program_id(1) == 0)
    def _():
        acc_ref[...] = jnp.zeros_like(acc_ref)

    xs = [r[...].astype(jnp.float32) for r in in_refs]
    if n_inputs == 3:
        h0, h1, h2 = xs
        hs = h0 + h1 + h2
        # sum_{i<j} (e_i - e_j)(h_i - h_j) == sum_i e_i * (3*h_i - (h0+h1+h2))
        val = jnp.exp(h0) * (3.0 * h0 - hs)
        val = val + jnp.exp(h1) * (3.0 * h1 - hs)
        val = val + jnp.exp(h2) * (3.0 * h2 - hs)
    else:
        p, q = xs
        val = (jnp.exp(p) - jnp.exp(q)) * (p - q)

    # Reduce only the slab axis: pure VPU adds of (8,128) vregs into the scratch.
    acc_ref[...] += jnp.sum(val, axis=0)

    @pl.when(pl.program_id(1) == pl.num_programs(1) - 1)
    def _():
        out_ref[0] = acc_ref[...]


def _softmax_sum_kernel(*refs, n_inputs):
    """Fused softmax(axis=0) path. Blocks are (L, c_tile); acc is (1, c_tile)."""
    in_refs = refs[:n_inputs]
    out_ref = refs[n_inputs]
    acc_ref = refs[n_inputs + 1]

    @pl.when(pl.program_id(1) == 0)
    def _():
        acc_ref[...] = jnp.zeros_like(acc_ref)

    def softmax0(x):
        m = jnp.max(x, axis=0, keepdims=True)
        e = jnp.exp(x - m)
        # one reciprocal per column + VPU multiplies (instead of L EUP divides)
        inv = 1.0 / jnp.sum(e, axis=0, keepdims=True)
        return e * inv

    ps = [softmax0(r[...].astype(jnp.float32)) for r in in_refs]
    if n_inputs == 3:
        p0, p1, p2 = ps
        psum = p0 + p1 + p2
        val = jnp.exp(p0) * (3.0 * p0 - psum)
        val = val + jnp.exp(p1) * (3.0 * p1 - psum)
        val = val + jnp.exp(p2) * (3.0 * p2 - psum)
    else:
        p, q = ps
        val = (jnp.exp(p) - jnp.exp(q)) * (p - q)

    acc_ref[...] += jnp.sum(val, axis=0, keepdims=True)   # (1, c_tile) lane partials

    @pl.when(pl.program_id(1) == pl.num_programs(1) - 1)
    def _():
        out_ref[0] = acc_ref[...]


# --------------------------------------------------------------------------
# pallas_call builders
# --------------------------------------------------------------------------
def _flat_total_sum(arrays):
    """sum over all elements of the (pair / triple) expression, no softmax."""
    n_inputs = len(arrays)
    n = arrays[0].size
    slabs = _cdiv(n, _SLAB)
    max_tile_slabs = max(1, _PER_BLOCK_BYTES // (_SLAB * 4))
    # Choose the tile count first, then the tile size, so slab-aligned inputs
    # tile exactly (no padding copy) and any residual padding is < one slab/tile.
    tiles_per_split = max(1, _cdiv(slabs, NSPLIT * max_tile_slabs))
    tile_slabs = max(1, _cdiv(slabs, NSPLIT * tiles_per_split))
    padded_slabs = NSPLIT * tiles_per_split * tile_slabs

    def prep(h):
        flat = h.reshape(-1)                      # contiguous: free reshape
        pad = padded_slabs * _SLAB - flat.shape[0]
        if pad:
            # TODO(synk): jnp.pad copies the array; only hit for sizes that do
            # not tile exactly — zeros contribute exactly 0 to the sum.
            flat = jnp.pad(flat, (0, pad))
        return flat.reshape(padded_slabs, 8, _LANES)

    arrs = [prep(h) for h in arrays]
    in_spec = pl.BlockSpec((tile_slabs, 8, _LANES),
                           lambda s, t: (s * tiles_per_split + t, 0, 0))
    out = pl.pallas_call(
        functools.partial(_flat_sum_kernel, n_inputs=n_inputs),
        out_shape=jax.ShapeDtypeStruct((NSPLIT, 8, _LANES), jnp.float32),
        grid_spec=pltpu.PrefetchScalarGridSpec(
            num_scalar_prefetch=0,
            grid=(NSPLIT, tiles_per_split),
            in_specs=[in_spec] * n_inputs,
            out_specs=pl.BlockSpec((1, 8, _LANES), lambda s, t: (s, 0, 0)),
            scratch_shapes=[pltpu.VMEM((8, _LANES), jnp.float32)],
        ),
        compiler_params=pltpu.CompilerParams(
            dimension_semantics=("parallel", "arbitrary"),
            vmem_limit_bytes=_VMEM_LIMIT),
    )(*arrs)
    return jnp.sum(out)   # tiny cross-lane reduce of the per-split partials


def _softmax_fused_total_sum(arrays):
    """sum over all elements, with softmax over axis 0 fused into the kernel."""
    n_inputs = len(arrays)
    L = arrays[0].shape[0]
    M = 1
    for d in arrays[0].shape[1:]:
        M *= d

    # TODO(synk): for pathological L (tens of thousands of rows) even a 128-lane
    # column block exceeds the 32 MiB scoped limit; would need a two-pass softmax.
    max_cols = max(_LANES, (_PER_BLOCK_BYTES // max(1, L * 4)) // _LANES * _LANES)
    cols_per_split = _cdiv(M, NSPLIT)
    tiles_per_split = max(1, _cdiv(cols_per_split, max_cols))
    c_tile = _round_up(_cdiv(M, NSPLIT * tiles_per_split), _LANES)
    padded_m = NSPLIT * tiles_per_split * c_tile

    def prep(h):
        x = h.reshape(L, M)                       # contiguous: free reshape
        pad = padded_m - M
        if pad:
            # zero columns softmax to identical uniform dists -> contribute 0
            x = jnp.pad(x, ((0, 0), (0, pad)))
        return x

    arrs = [prep(h) for h in arrays]
    in_spec = pl.BlockSpec((L, c_tile),
                           lambda s, t: (0, s * tiles_per_split + t))
    out = pl.pallas_call(
        functools.partial(_softmax_sum_kernel, n_inputs=n_inputs),
        out_shape=jax.ShapeDtypeStruct((NSPLIT, 1, c_tile), jnp.float32),
        grid_spec=pltpu.PrefetchScalarGridSpec(
            num_scalar_prefetch=0,
            grid=(NSPLIT, tiles_per_split),
            in_specs=[in_spec] * n_inputs,
            out_specs=pl.BlockSpec((1, 1, c_tile), lambda s, t: (s, 0, 0)),
            scratch_shapes=[pltpu.VMEM((1, c_tile), jnp.float32)],
        ),
        compiler_params=pltpu.CompilerParams(
            dimension_semantics=("parallel", "arbitrary"),
            vmem_limit_bytes=_VMEM_LIMIT),
    )(*arrs)
    return jnp.sum(out)


# --------------------------------------------------------------------------
# Module-equivalent wrapper
# --------------------------------------------------------------------------
def multi_jsd(h_list, get_softmax=False):
    """Pallas implementation of MultiJSD.forward for (L, B, D) inputs."""
    L = h_list[0].shape[0]
    batch_size = h_list[0].shape[1]

    if len(h_list) == 3:
        if get_softmax:
            total = _softmax_fused_total_sum(list(h_list))
        else:
            # NOTE: exp() of raw (unnormalized) activations reproduces the
            # PyTorch quirk; can overflow for large activations (kept in f32).
            total = _flat_total_sum(list(h_list))
        # each pair / (4L), averaged over 3 pairs, / batch_size
        return total / (12.0 * L * batch_size)

    elif len(h_list) == 2:
        # m_jsd with its default get_softmax=True (softmax fused in-kernel)
        total = _softmax_fused_total_sum(list(h_list))
        return total / (4.0 * L * batch_size)

    else:
        return jnp.float32(0.0)


# --------------------------------------------------------------------------
# Pure-JAX reference (straight transcription of the PyTorch module)
# --------------------------------------------------------------------------
def _ref_m_jsd(p, q, get_softmax=True):
    if get_softmax:
        p = jax.nn.softmax(p, axis=0)
        q = jax.nn.softmax(q, axis=0)
    m = (p + q) / 2.0
    L = p.shape[0]

    def kl_div_batchmean_logtarget(inp, tgt):
        return jnp.sum(jnp.exp(tgt) * (tgt - inp)) / L

    return (kl_div_batchmean_logtarget(m, p)
            + kl_div_batchmean_logtarget(m, q)) / 2.0


def _ref_forward(h_list, get_softmax=False):
    batch_size = h_list[0].shape[1]
    if len(h_list) == 3:
        loss = (_ref_m_jsd(h_list[0], h_list[1], get_softmax)
                + _ref_m_jsd(h_list[1], h_list[2], get_softmax)
                + _ref_m_jsd(h_list[2], h_list[0], get_softmax)) / 3.0
    elif len(h_list) == 2:
        loss = _ref_m_jsd(h_list[0], h_list[1])
    else:
        loss = 0.0
    return loss / batch_size


# --------------------------------------------------------------------------
if __name__ == "__main__":
    key = jax.random.PRNGKey(0)
    L, B, D = 8, 2, 32  # (seq, batch, hidden)
    k0, k1, k2 = jax.random.split(key, 3)
    h0 = jax.random.normal(k0, (L, B, D), dtype=jnp.float32)
    h1 = jax.random.normal(k1, (L, B, D), dtype=jnp.float32)
    h2 = jax.random.normal(k2, (L, B, D), dtype=jnp.float32)

    # 3-tensor path (module default: get_softmax=False)
    out3 = jax.block_until_ready(multi_jsd([h0, h1, h2], get_softmax=False))
    ref3 = _ref_forward([h0, h1, h2], get_softmax=False)
    assert jnp.allclose(out3, ref3, rtol=1e-4, atol=1e-6), (out3, ref3)

    # 3-tensor path with fused softmax
    out3s = jax.block_until_ready(multi_jsd([h0, h1, h2], get_softmax=True))
    ref3s = _ref_forward([h0, h1, h2], get_softmax=True)
    assert jnp.allclose(out3s, ref3s, rtol=1e-4, atol=1e-6), (out3s, ref3s)

    # 2-tensor path (m_jsd with its default softmax, fused in-kernel)
    out2 = jax.block_until_ready(multi_jsd([h0, h1]))
    ref2 = _ref_forward([h0, h1])
    assert jnp.allclose(out2, ref2, rtol=1e-4, atol=1e-6), (out2, ref2)

    # Awkward shapes exercising the zero-padding paths
    La, Ba, Da = 10, 3, 50
    g0 = jax.random.normal(jax.random.PRNGKey(1), (La, Ba, Da), jnp.float32)
    g1 = jax.random.normal(jax.random.PRNGKey(2), (La, Ba, Da), jnp.float32)
    g2 = jax.random.normal(jax.random.PRNGKey(3), (La, Ba, Da), jnp.float32)
    outa = jax.block_until_ready(multi_jsd([g0, g1, g2], get_softmax=False))
    refa = _ref_forward([g0, g1, g2], get_softmax=False)
    assert jnp.allclose(outa, refa, rtol=1e-4, atol=1e-6), (outa, refa)
    outb = jax.block_until_ready(multi_jsd([g0, g1]))
    refb = _ref_forward([g0, g1])
    assert jnp.allclose(outb, refb, rtol=1e-4, atol=1e-6), (outb, refb)

    print("KERNEL_OK")
</pallas_src>

<mosaic_0001>
module attributes {stable_mosaic.version = 11 : i64} {
  func.func @_flat_sum_kernel(%arg0: i32, %arg1: i32, %arg2: memref<1x8x128xf32, #tpu.memory_space<vmem>>, %arg3: memref<1x8x128xf32, #tpu.memory_space<vmem>>, %arg4: memref<1x8x128xf32, #tpu.memory_space<vmem>>, %arg5: memref<1x8x128xf32, #tpu.memory_space<vmem>>, %arg6: memref<8x128xf32, #tpu.memory_space<vmem>>) attributes {dimension_semantics = [#tpu.dimension_semantics<parallel>, #tpu.dimension_semantics<arbitrary>], iteration_bounds = array<i64: 2, 1>, scalar_prefetch = 0 : i64, scratch_operands = 1 : i64, tpu.core_type = #tpu.core_type<tc>, window_params = [{transform_indices = @transform_0, window_bounds = array<i64: 1, 8, 128>}, {transform_indices = @transform_1, window_bounds = array<i64: 1, 8, 128>}, {transform_indices = @transform_2, window_bounds = array<i64: 1, 8, 128>}, {transform_indices = @transform_3, window_bounds = array<i64: 1, 8, 128>}]} {
    %c0_i32 = arith.constant 0 : i32
    %0 = arith.cmpi eq, %arg1, %c0_i32 : i32
    %1 = arith.extui %0 : i1 to i32
    %c0_i32_0 = arith.constant 0 : i32
    %2 = arith.cmpi ne, %1, %c0_i32_0 : i32
    scf.if %2 {
      %cst_18 = arith.constant 0.000000e+00 : f32
      %32 = vector.broadcast %cst_18 : f32 to vector<8x128xf32>
      %c0_19 = arith.constant 0 : index
      %c0_20 = arith.constant 0 : index
      %33 = vector.load %arg6[%c0_19, %c0_20] : memref<8x128xf32, #tpu.memory_space<vmem>>, vector<8x128xf32>
      tpu.vector_store %arg6[%c0_19, %c0_20], %32 {strides = array<i32>} : memref<8x128xf32, #tpu.memory_space<vmem>>, vector<8x128xf32>,
    } else {
    }
    %c0 = arith.constant 0 : index
    %c0_1 = arith.constant 0 : index
    %c0_2 = arith.constant 0 : index
    %3 = vector.load %arg2[%c0, %c0_1, %c0_2] : memref<1x8x128xf32, #tpu.memory_space<vmem>>, vector<1x8x128xf32>
    %c0_3 = arith.constant 0 : index
    %c0_4 = arith.constant 0 : index
    %c0_5 = arith.constant 0 : index
    %4 = vector.load %arg3[%c0_3, %c0_4, %c0_5] : memref<1x8x128xf32, #tpu.memory_space<vmem>>, vector<1x8x128xf32>
    %c0_6 = arith.constant 0 : index
    %c0_7 = arith.constant 0 : index
    %c0_8 = arith.constant 0 : index
    %5 = vector.load %arg4[%c0_6, %c0_7, %c0_8] : memref<1x8x128xf32, #tpu.memory_space<vmem>>, vector<1x8x128xf32>
    %6 = arith.addf %3, %4 : vector<1x8x128xf32>
    %7 = arith.addf %6, %5 : vector<1x8x128xf32>
    %8 = math.exp %3 : vector<1x8x128xf32>
    %cst = arith.constant 3.000000e+00 : f32
    %9 = vector.broadcast %cst : f32 to vector<1x8x128xf32>
    %10 = arith.mulf %9, %3 : vector<1x8x128xf32>
    %11 = arith.subf %10, %7 : vector<1x8x128xf32>
    %12 = arith.mulf %8, %11 : vector<1x8x128xf32>
    %13 = math.exp %4 : vector<1x8x128xf32>
    %cst_9 = arith.constant 3.000000e+00 : f32
    %14 = vector.broadcast %cst_9 : f32 to vector<1x8x128xf32>
    %15 = arith.mulf %14, %4 : vector<1x8x128xf32>
    %16 = arith.subf %15, %7 : vector<1x8x128xf32>
    %17 = arith.mulf %13, %16 : vector<1x8x128xf32>
    %18 = arith.addf %12, %17 : vector<1x8x128xf32>
    %19 = math.exp %5 : vector<1x8x128xf32>
    %cst_10 = arith.constant 3.000000e+00 : f32
    %20 = vector.broadcast %cst_10 : f32 to vector<1x8x128xf32>
    %21 = arith.mulf %20, %5 : vector<1x8x128xf32>
    %22 = arith.subf %21, %7 : vector<1x8x128xf32>
    %23 = arith.mulf %19, %22 : vector<1x8x128xf32>
    %24 = arith.addf %18, %23 : vector<1x8x128xf32>
    %c0_11 = arith.constant 0 : index
    %c0_12 = arith.constant 0 : index
    %25 = vector.load %arg6[%c0_11, %c0_12] : memref<8x128xf32, #tpu.memory_space<vmem>>, vector<8x128xf32>
    %cst_13 = arith.constant dense<0.000000e+00> : vector<8x128xf32>
    %26 = vector.multi_reduction <add>, %24, %cst_13 [0] : vector<1x8x128xf32> to vector<8x128xf32>
    %27 = arith.addf %25, %26 : vector<8x128xf32>
    %c0_14 = arith.constant 0 : index
    %c0_15 = arith.constant 0 : index
    %28 = vector.load %arg6[%c0_14, %c0_15] : memref<8x128xf32, #tpu.memory_space<vmem>>, vector<8x128xf32>
    tpu.vector_store %arg6[%c0_14, %c0_15], %27 {strides = array<i32>} : memref<8x128xf32, #tpu.memory_space<vmem>>, vector<8x128xf32>,
    %c0_i32_16 = arith.constant 0 : i32
    %29 = arith.cmpi eq, %arg1, %c0_i32_16 : i32
    %30 = arith.extui %29 : i1 to i32
    %c0_i32_17 = arith.constant 0 : i32
    %31 = arith.cmpi ne, %30, %c0_i32_17 : i32
    scf.if %31 {
      %c0_18 = arith.constant 0 : index
      %c0_19 = arith.constant 0 : index
      %32 = vector.load %arg6[%c0_18, %c0_19] : memref<8x128xf32, #tpu.memory_space<vmem>>, vector<8x128xf32>
      %c0_20 = arith.constant 0 : index
      %c0_21 = arith.constant 0 : index
      %c0_22 = arith.constant 0 : index
      %33 = vector.load %arg5[%c0_20, %c0_21, %c0_22] : memref<1x8x128xf32, #tpu.memory_space<vmem>>, vector<1x8x128xf32>
      %34 = vector.shape_cast %33 : vector<1x8x128xf32> to vector<8x128xf32>
      %35 = vector.shape_cast %32 : vector<8x128xf32> to vector<1x8x128xf32>
      tpu.vector_store %arg5[%c0_20, %c0_21, %c0_22], %35 {strides = array<i32>} : memref<1x8x128xf32, #tpu.memory_space<vmem>>, vector<1x8x128xf32>,
    } else {
    }
    return
  }
  func.func @transform_0(%arg0: i32, %arg1: i32) -> (i32, i32, i32) {
    %c1_i32 = arith.constant 1 : i32
    %0 = arith.muli %arg0, %c1_i32 : i32
    %1 = arith.addi %0, %arg1 : i32
    %c0_i32 = arith.constant 0 : i32
    %c0_i32_0 = arith.constant 0 : i32
    %c0_i32_1 = arith.constant 0 : i32
    return %1, %c0_i32, %c0_i32_0 : i32, i32, i32
  }
  func.func @transform_1(%arg0: i32, %arg1: i32) -> (i32, i32, i32) {
    %c1_i32 = arith.constant 1 : i32
    %0 = arith.muli %arg0, %c1_i32 : i32
    %1 = arith.addi %0, %arg1 : i32
    %c0_i32 = arith.constant 0 : i32
    %c0_i32_0 = arith.constant 0 : i32
    %c0_i32_1 = arith.constant 0 : i32
    return %1, %c0_i32, %c0_i32_0 : i32, i32, i32
  }
  func.func @transform_2(%arg0: i32, %arg1: i32) -> (i32, i32, i32) {
    %c1_i32 = arith.constant 1 : i32
    %0 = arith.muli %arg0, %c1_i32 : i32
    %1 = arith.addi %0, %arg1 : i32
    %c0_i32 = arith.constant 0 : i32
    %c0_i32_0 = arith.constant 0 : i32
    %c0_i32_1 = arith.constant 0 : i32
    return %1, %c0_i32, %c0_i32_0 : i32, i32, i32
  }
  func.func @transform_3(%arg0: i32, %arg1: i32) -> (i32, i32, i32) {
    %c0_i32 = arith.constant 0 : i32
    %c0_i32_0 = arith.constant 0 : i32
    %c0_i32_1 = arith.constant 0 : i32
    return %arg0, %c0_i32, %c0_i32_0 : i32, i32, i32
  }
}

</mosaic_0001>

<llo_original>
// kernel: tpu_custom_call.1
$region0: #{tpu_custom_call.1}
  #allocation0 [shape = 'u32[]', space=smem, size = 0x4, offset = 0x4, fixed_abs, tag = 'smem constant byte address 0x4 - core index']
  #allocation1 [shape = 'u32[144,128]{1,0:T(1,128)}', space=vmem, size = 0x12000, scoped, tag = 'internal scratch']
  #allocation2 [shape = 'f32[8,128]{1,0:T(8,128)}', space=vmem, size = 0x1000, scoped, tag = 'scratch operand']
  %s0 = inlined_call_operand.hbm [shape: f32[2,8,128], index: 0, kind: input, shape index: {}]
  %s1 = inlined_call_operand.hbm [shape: f32[2,8,128], index: 1, kind: input, shape index: {}]
  %s2 = inlined_call_operand.hbm [shape: f32[2,8,128], index: 2, kind: input, shape index: {}]
  %s3 = inlined_call_operand.hbm [shape: f32[2,8,128], index: 3, kind: output, shape index: {}]
  %s4 = sld [smem:[#allocation0]]
  $region65: #{tpu_custom_call.1} parent=0
    _
  %s6 = ssub.s32 1, %s4
  %s7 = scalar_select 0, %s6, %s4
  $region1: #{tpu_custom_call.1} parent=0
    #allocation3 [shape = 'u8[8192]{0}', space=vmem, size = 0x2000, scoped, tag = 'input window, operand 0']
    #allocation4 [shape = 's32[2]{0}', space=sflag, size = 0x8, scoped, tag = 'scoped memory for tpu_custom_call.1']
    #allocation5 [shape = 's32[2]{0}', space=sflag, size = 0x8, scoped, tag = 'scoped memory for tpu_custom_call.1']
    #allocation6 [shape = 'u8[8192]{0}', space=vmem, size = 0x2000, scoped, tag = 'input window, operand 1']
    #allocation7 [shape = 's32[2]{0}', space=sflag, size = 0x8, scoped, tag = 'scoped memory for tpu_custom_call.1']
    #allocation8 [shape = 'u8[8192]{0}', space=vmem, size = 0x2000, scoped, tag = 'input window, operand 2']
    #allocation9 [shape = 'u8[8192]{0}', space=vmem, size = 0x2000, scoped, tag = 'output window, operand 0']
    %8 = vsyncpa [#allocation4], 0
    %s9 = scalar_lea.sflag [#allocation4], 1
    %10 = vsyncpa %s9, 0
    %11 = vsyncpa [#allocation7], 0
    %s12 = scalar_lea.sflag [#allocation7], 1
    %13 = vsyncpa %s12, 0
    %14 = vsyncpa [#allocation5], 0
    %s15 = scalar_lea.sflag [#allocation5], 1
    %16 = vsyncpa %s15, 0
    loop: start=0, step=1, limit=4
    $region2: #{tpu_custom_call.1} parent=1 // loop_pre_header
      _
    $region3: #{tpu_custom_call.1} parent=1 // loop_header
      %s18 = sphi 0, %s22
      %p19 = scmp.ge.s32.totalorder %s18, 4
      %s25 = sphi 0, %s37
      %s26 = sphi 0, %s33
      %s27 = sphi 0, %s25
      %s28 = sphi 0, %s26
      %s29 = sphi 0, %s27
      %s30 = sphi 0, %s28
      %s42 = sphi 0, %s44
      %s45 = sphi 0, %s42
      %s46 = sphi 0, %s45
      %s62 = sphi 0, %s46
      %s70 = sphi 0, %s72
      %s73 = sphi 0, %s70
      %s74 = sphi 0, %s73
      %s90 = sphi 0, %s74
      %s98 = sphi 0, %s100
      %s101 = sphi 0, %s98
      %s102 = sphi 0, %s101
      %s118 = sphi 0, %s102
      %s124 = sphi 0, %s126
      %s127 = sphi 0, %s124
      %s128 = sphi 0, %s127
      %s144 = sphi 0, %s128
    $region4: #{tpu_custom_call.1} parent=1 // loop_header_branch
      %21 = sbr.rel (%p19) target = $region8
    $region5: #{tpu_custom_call.1} parent=1 // loop_body
      %s23 = ssub.s32 %s18, 1
      %s24 = ssub.s32 %s18, 2
      %s31 = sadd.s32 1, %s26
      %p32 = scmp.ge.s32.totalorder %s31, 1
      %s33 = scalar_select %p32, 0, %s31
      %s34 = sadd.s32 1, %s25
      %s35 = scalar_select %p32, %s34, %s25
      %p36 = scmp.ge.s32.totalorder %s35, 2
      %s37 = scalar_select %p36, 0, %s35
      %s38 = sadd.s32 %s25, %s26
      %s39 = sadd.s32 %s37, %s33
      %s40 = ssub.s32 %s38, %s39
      %p41 = scmp.eq.s32.totalorder %s40, 0
      %s43 = sadd.s32 %s42, 1
      %s44 = scalar_select %p41, %s42, %s43
      %p47 = pneg %p41
      %p48 = scmp.eq.s32.totalorder %s18, 1
      %p49 = por %p47, %p48
      %p50 = scmp.ne.s32.totalorder %s42, %s45
      %p51 = scmp.eq.s32.totalorder %s18, 0
      %p52 = por %p50, %p51
      %p53 = scmp.ne.s32.totalorder %s42, %s45
      %p54 = scmp.eq.s32.totalorder %s23, 1
      %p55 = por %p53, %p54
      %p56 = scmp.ne.s32.totalorder %s45, %s46
      %p57 = scmp.eq.s32.totalorder %s23, 0
      %p58 = por %p56, %p57
      %p59 = scmp.ne.s32.totalorder %s45, %s46
      %p60 = scmp.eq.s32.totalorder %s24, 1
      %p61 = por %p59, %p60
      %p63 = scmp.ne.s32.totalorder %s46, %s62
      %p64 = scmp.eq.s32.totalorder %s24, 0
      %p65 = por %p63, %p64
      %s66 = sadd.s32 %s25, %s26
      %s67 = sadd.s32 %s37, %s33
      %s68 = ssub.s32 %s66, %s67
      %p69 = scmp.eq.s32.totalorder %s68, 0
      %s71 = sadd.s32 %s70, 1
      %s72 = scalar_select %p69, %s70, %s71
      %p75 = pneg %p69
      %p76 = scmp.eq.s32.totalorder %s18, 1
      %p77 = por %p75, %p76
      %p78 = scmp.ne.s32.totalorder %s70, %s73
      %p79 = scmp.eq.s32.totalorder %s18, 0
      %p80 = por %p78, %p79
      %p81 = scmp.ne.s32.totalorder %s70, %s73
      %p82 = scmp.eq.s32.totalorder %s23, 1
      %p83 = por %p81, %p82
      %p84 = scmp.ne.s32.totalorder %s73, %s74
      %p85 = scmp.eq.s32.totalorder %s23, 0
      %p86 = por %p84, %p85
      %p87 = scmp.ne.s32.totalorder %s73, %s74
      %p88 = scmp.eq.s32.totalorder %s24, 1
      %p89 = por %p87, %p88
      %p91 = scmp.ne.s32.totalorder %s74, %s90
      %p92 = scmp.eq.s32.totalorder %s24, 0
      %p93 = por %p91, %p92
      %s94 = sadd.s32 %s25, %s26
      %s95 = sadd.s32 %s37, %s33
      %s96 = ssub.s32 %s94, %s95
      %p97 = scmp.eq.s32.totalorder %s96, 0
      %s99 = sadd.s32 %s98, 1
      %s100 = scalar_select %p97, %s98, %s99
      %p103 = pneg %p97
      %p104 = scmp.eq.s32.totalorder %s18, 1
      %p105 = por %p103, %p104
      %p106 = scmp.ne.s32.totalorder %s98, %s101
      %p107 = scmp.eq.s32.totalorder %s18, 0
      %p108 = por %p106, %p107
      %p109 = scmp.ne.s32.totalorder %s98, %s101
      %p110 = scmp.eq.s32.totalorder %s23, 1
      %p111 = por %p109, %p110
      %p112 = scmp.ne.s32.totalorder %s101, %s102
      %p113 = scmp.eq.s32.totalorder %s23, 0
      %p114 = por %p112, %p113
      %p115 = scmp.ne.s32.totalorder %s101, %s102
      %p116 = scmp.eq.s32.totalorder %s24, 1
      %p117 = por %p115, %p116
      %p119 = scmp.ne.s32.totalorder %s102, %s118
      %p120 = scmp.eq.s32.totalorder %s24, 0
      %p121 = por %p119, %p120
      %s122 = ssub.s32 %s25, %s37
      %p123 = scmp.eq.s32.totalorder %s122, 0
      %s125 = sadd.s32 %s124, 1
      %s126 = scalar_select %p123, %s124, %s125
      %p129 = pneg %p123
      %p130 = scmp.eq.s32.totalorder %s18, 1
      %p131 = por %p129, %p130
      %p132 = scmp.ne.s32.totalorder %s124, %s127
      %p133 = scmp.eq.s32.totalorder %s18, 0
      %p134 = por %p132, %p133
      %p135 = scmp.ne.s32.totalorder %s124, %s127
      %p136 = scmp.eq.s32.totalorder %s23, 1
      %p137 = por %p135, %p136
      %p138 = scmp.ne.s32.totalorder %s127, %s128
      %p139 = scmp.eq.s32.totalorder %s23, 0
      %p140 = por %p138, %p139
      %p141 = scmp.ne.s32.totalorder %s127, %s128
      %p142 = scmp.eq.s32.totalorder %s24, 1
      %p143 = por %p141, %p142
      %p145 = scmp.ne.s32.totalorder %s128, %s144
      %p146 = scmp.eq.s32.totalorder %s24, 0
      %p147 = por %p145, %p146
      %p148 = scmp.le.s32.totalorder 1, %s18
      %p149 = scmp.lt.s32.totalorder %s18, 3
      %p150 = pnand %p148, %p149
      %p151 = pneg %p150
      // Predicated region
      $region9: #{tpu_custom_call.1} parent=5 // pred_check
        _
      $region10: #{tpu_custom_call.1} parent=5 // pred_check_branch
        %153 = sbr.rel (%p150) target = $region12
      $region11: #{tpu_custom_call.1} parent=5 // pred_region
        %s154 = ssub.s32 %s18, 1
      $region12: #{tpu_custom_call.1} parent=5 // pred_fallthru
        _
      %p155 = scmp.lt.s32.totalorder %s18, 2
      // Predicated region
      $region13: #{tpu_custom_call.1} parent=5 // pred_check
        %p156 = pneg %p155
      $region14: #{tpu_custom_call.1} parent=5 // pred_check_branch
        %158 = sbr.rel (%p156) target = $region16
      $region15: #{tpu_custom_call.1} parent=5 // pred_region
        // Predicated region
        $region17: #{tpu_custom_call.1} parent=15 // pred_check
          %p159 = pneg %p52
        $region18: #{tpu_custom_call.1} parent=15 // pred_check_branch
          %161 = sbr.rel (%p159) target = $region20
        $region19: #{tpu_custom_call.1} parent=15 // pred_region
          %s162 = sand.u32 %s42, 1
          %s163 = scalar_lea.sflag [#allocation4], %s162
          %s164 = sand.u32 %s42, 1
          %s165 = smul.addr %s164, 8
          %s166 = scalar_lea.vmem [#allocation3], %s165
          %s167 = sadd.s32 %s25, %s26
          %s169 = ssub.s32 128, 128
          %170 = vsyncadd %s163, %s169
          %s171 = smul.addr %s167, 128
          %s172 = scalar_lea.hbm %s0, %s171
          %s174 = sshll.u32 %s166, 4
          %s175 = int_to_ptr.vmem [resolvable:$true] %s174
          %177 = dma.hbm_to_vmem [thread:$0]  %s172, 128, %s175, %s163
        $region20: #{tpu_custom_call.1} parent=15 // pred_fallthru
          _
        // Predicated region
        $region21: #{tpu_custom_call.1} parent=15 // pred_check
          %p178 = pneg %p80
        $region22: #{tpu_custom_call.1} parent=15 // pred_check_branch
          %180 = sbr.rel (%p178) target = $region24
        $region23: #{tpu_custom_call.1} parent=15 // pred_region
          %s181 = sand.u32 %s18, 1
          %s182 = scalar_lea.sflag [#allocation7], %s181
          %s183 = sand.u32 %s70, 1
          %s184 = smul.addr %s183, 8
          %s185 = scalar_lea.vmem [#allocation6], %s184
          %s186 = sadd.s32 %s25, %s26
          %s188 = ssub.s32 128, 128
          %189 = vsyncadd %s182, %s188
          %s190 = smul.addr %s186, 128
          %s191 = scalar_lea.hbm %s1, %s190
          %s193 = sshll.u32 %s185, 4
          %s194 = int_to_ptr.vmem [resolvable:$true] %s193
          %196 = dma.hbm_to_vmem [thread:$0]  %s191, 128, %s194, %s182
        $region24: #{tpu_custom_call.1} parent=15 // pred_fallthru
          _
        // Predicated region
        $region25: #{tpu_custom_call.1} parent=15 // pred_check
          %p197 = pneg %p108
        $region26: #{tpu_custom_call.1} parent=15 // pred_check_branch
          %199 = sbr.rel (%p197) target = $region28
        $region27: #{tpu_custom_call.1} parent=15 // pred_region
          %s200 = sand.u32 %s18, 1
          %s201 = scalar_lea.sflag [#allocation7], %s200
          %s202 = sand.u32 %s98, 1
          %s203 = smul.addr %s202, 8
          %s204 = scalar_lea.vmem [#allocation8], %s203
          %s205 = sadd.s32 %s25, %s26
          %s207 = ssub.s32 128, 128
          %208 = vsyncadd %s201, %s207
          %s209 = smul.addr %s205, 128
          %s210 = scalar_lea.hbm %s2, %s209
          %s212 = sshll.u32 %s204, 4
          %s213 = int_to_ptr.vmem [resolvable:$true] %s212
          %215 = dma.hbm_to_vmem [thread:$0]  %s210, 128, %s213, %s201
        $region28: #{tpu_custom_call.1} parent=15 // pred_fallthru
          _
      $region16: #{tpu_custom_call.1} parent=5 // pred_fallthru
        _
      %p216 = scmp.le.s32.totalorder 1, %s18
      %p217 = scmp.lt.s32.totalorder %s18, 3
      %p218 = pnand %p216, %p217
      %p219 = pneg %p218
      // Predicated region
      $region29: #{tpu_custom_call.1} parent=5 // pred_check
        _
      $region30: #{tpu_custom_call.1} parent=5 // pred_check_branch
        %221 = sbr.rel (%p218) target = $region32
      $region31: #{tpu_custom_call.1} parent=5 // pred_region
        %s222 = ssub.s32 %s18, 1
        %s223 = sand.u32 %s45, 1
        %s224 = scalar_lea.sflag [#allocation4], %s223
        %s225 = sand.u32 %s45, 1
        %s226 = smul.addr %s225, 8
        %s227 = scalar_lea.vmem [#allocation3], %s226
        // Predicated region
        $region33: #{tpu_custom_call.1} parent=31 // pred_check
          %p228 = pneg %p58
        $region34: #{tpu_custom_call.1} parent=31 // pred_check_branch
          %230 = sbr.rel (%p228) target = $region36
        $region35: #{tpu_custom_call.1} parent=31 // pred_region
          %231 = dma.done %s224, 128
        $region36: #{tpu_custom_call.1} parent=31 // pred_fallthru
          _
        %s232 = sand.u32 %s23, 1
        %s233 = scalar_lea.sflag [#allocation7], %s232
        %s234 = sand.u32 %s73, 1
        %s235 = smul.addr %s234, 8
        %s236 = scalar_lea.vmem [#allocation6], %s235
        // Predicated region
        $region37: #{tpu_custom_call.1} parent=31 // pred_check
          %p237 = pneg %p86
        $region38: #{tpu_custom_call.1} parent=31 // pred_check_branch
          %239 = sbr.rel (%p237) target = $region40
        $region39: #{tpu_custom_call.1} parent=31 // pred_region
          %240 = dma.done %s233, 128
        $region40: #{tpu_custom_call.1} parent=31 // pred_fallthru
          _
        %s241 = sand.u32 %s23, 1
        %s242 = scalar_lea.sflag [#allocation7], %s241
        %s243 = sand.u32 %s101, 1
        %s244 = smul.addr %s243, 8
        %s245 = scalar_lea.vmem [#allocation8], %s244
        // Predicated region
        $region41: #{tpu_custom_call.1} parent=31 // pred_check
          %p246 = pneg %p114
        $region42: #{tpu_custom_call.1} parent=31 // pred_check_branch
          %248 = sbr.rel (%p246) target = $region44
        $region43: #{tpu_custom_call.1} parent=31 // pred_region
          %249 = dma.done %s242, 128
        $region44: #{tpu_custom_call.1} parent=31 // pred_fallthru
          _
        %s250 = sand.u32 %s45, 1
        %s251 = scalar_lea.sflag [#allocation4], %s250
        %s252 = sand.u32 %s45, 1
        %s253 = smul.addr %s252, 8
        %s254 = scalar_lea.vmem [#allocation3], %s253
        %p255 = pneg %p58
        %p256 = pneg %p55
        %s257 = sand.u32 %s23, 1
        %s258 = scalar_lea.sflag [#allocation7], %s257
        %s259 = sand.u32 %s73, 1
        %s260 = smul.addr %s259, 8
        %s261 = scalar_lea.vmem [#allocation6], %s260
        %p262 = pneg %p86
        %p263 = pneg %p83
        %s264 = sand.u32 %s23, 1
        %s265 = scalar_lea.sflag [#allocation7], %s264
        %s266 = sand.u32 %s101, 1
        %s267 = smul.addr %s266, 8
        %s268 = scalar_lea.vmem [#allocation8], %s267
        %p269 = pneg %p114
        %p270 = pneg %p111
        %p271 = pneg %p140
        %p272 = pneg %p137
        %s273 = sand.u32 %s127, 1
        %s274 = scalar_lea.sflag [#allocation5], %s273
        %s275 = sand.u32 %s127, 1
        %s276 = smul.addr %s275, 8
        %s277 = scalar_lea.vmem [#allocation9], %s276
        %s278 = sadd.s32 %s27, %s28
        %s279 = sadd.s32 %s27, %s28
        %s280 = sadd.s32 %s27, %s28
        %p281 = scmp.eq.s32.totalorder %s28, 0
        // Predicated region
        $region45: #{tpu_custom_call.1} parent=31 // pred_check
          %p282 = pneg %p281
        $region46: #{tpu_custom_call.1} parent=31 // pred_check_branch
          %284 = sbr.rel (%p282) target = $region48
        $region47: #{tpu_custom_call.1} parent=31 // pred_region
          %285 = vst [vmem:[#allocation2] sm:$0xff] 0.0
        $region48: #{tpu_custom_call.1} parent=31 // pred_fallthru
          _
        %v286 = vld [vmem:[%s227] sm:$0xff]
        %v287 = vld [vmem:[%s236] sm:$0xff]
        %v288 = vld [vmem:[%s245] sm:$0xff]
        %v289 = vadd.f32 %v286, %v287
        %v290 = vadd.f32 %v289, %v288
        %v291 = vmul.f32 %v286, 1.442695
        %v292 = vpow.pop %v291
        %v293 = vmul.f32 %v286, 3.0
        %v294 = vsub.f32 %v293, %v290
        %v295 = vmul.f32 %v292, %v294
        %v296 = vmul.f32 %v287, 1.442695
        %v297 = vpow.pop %v296
        %v298 = vmul.f32 %v287, 3.0
        %v299 = vsub.f32 %v298, %v290
        %v300 = vmul.f32 %v297, %v299
        %v301 = vadd.f32 %v295, %v300
        %v302 = vmul.f32 %v288, 1.442695
        %v303 = vpow.pop %v302
        %v304 = vmul.f32 %v288, 3.0
        %v305 = vsub.f32 %v304, %v290
        %v306 = vmul.f32 %v303, %v305
        %v307 = vadd.f32 %v301, %v306
        %v308 = vld [vmem:[#allocation2] sm:$0xff]
        %v309 = vadd.f32 %v307, 0.0
        %v310 = vadd.f32 %v308, %v309
        %311 = vst [vmem:[#allocation2] sm:$0xff] %v310
        // Predicated region
        $region49: #{tpu_custom_call.1} parent=31 // pred_check
          %p312 = pneg %p281
        $region50: #{tpu_custom_call.1} parent=31 // pred_check_branch
          %314 = sbr.rel (%p312) target = $region52
        $region51: #{tpu_custom_call.1} parent=31 // pred_region
          %v315 = vld [vmem:[#allocation2] sm:$0xff]
          %316 = vst [vmem:[%s277] sm:$0xff] %v315
        $region52: #{tpu_custom_call.1} parent=31 // pred_fallthru
          _
        %s317 = sand.u32 %s127, 1
        %s318 = scalar_lea.sflag [#allocation5], %s317
        %s319 = sand.u32 %s127, 1
        %s320 = smul.addr %s319, 8
        %s321 = scalar_lea.vmem [#allocation9], %s320
        // Predicated region
        $region53: #{tpu_custom_call.1} parent=31 // pred_check
          %p322 = pneg %p137
        $region54: #{tpu_custom_call.1} parent=31 // pred_check_branch
          %324 = sbr.rel (%p322) target = $region56
        $region55: #{tpu_custom_call.1} parent=31 // pred_region
          %s326 = ssub.s32 128, 128
          %327 = vsyncadd %s318, %s326
          %s328 = smul.addr %s27, 128
          %s329 = scalar_lea.hbm %s3, %s328
          %s331 = sshll.u32 %s321, 4
          %s332 = int_to_ptr.vmem [resolvable:$true] %s331
          %334 = dma.vmem_to_hbm [thread:$0]  %s332, 128, %s329, %s318
        $region56: #{tpu_custom_call.1} parent=31 // pred_fallthru
          _
      $region32: #{tpu_custom_call.1} parent=5 // pred_fallthru
        _
      %p335 = scmp.le.s32.totalorder 2, %s18
      // Predicated region
      $region57: #{tpu_custom_call.1} parent=5 // pred_check
        %p336 = pneg %p335
      $region58: #{tpu_custom_call.1} parent=5 // pred_check_branch
        %338 = sbr.rel (%p336) target = $region60
      $region59: #{tpu_custom_call.1} parent=5 // pred_region
        %s339 = ssub.s32 %s18, 2
        // Predicated region
        $region61: #{tpu_custom_call.1} parent=59 // pred_check
          %p340 = pneg %p143
        $region62: #{tpu_custom_call.1} parent=59 // pred_check_branch
          %342 = sbr.rel (%p340) target = $region64
        $region63: #{tpu_custom_call.1} parent=59 // pred_region
          %s343 = sand.u32 %s128, 1
          %s344 = scalar_lea.sflag [#allocation5], %s343
          %s345 = sand.u32 %s128, 1
          %s346 = smul.addr %s345, 8
          %s347 = scalar_lea.vmem [#allocation9], %s346
          %348 = dma.done %s344, 128
        $region64: #{tpu_custom_call.1} parent=59 // pred_fallthru
          _
      $region60: #{tpu_custom_call.1} parent=5 // pred_fallthru
        _
    $region6: #{tpu_custom_call.1} parent=1 // loop_footer
      %s22 = sadd.s32 1, %s18
    $region7: #{tpu_custom_call.1} parent=1 // loop_footer_branch
      %17 = sbr.rel target = $region3
    $region8: #{tpu_custom_call.1} parent=1 // loop_exit
      _
    %349 = vsyncpa [#allocation4], 1
    %s350 = scalar_lea.sflag [#allocation4], 1
    %351 = vsyncpa %s350, 1
    %352 = vsyncpa [#allocation7], 1
    %s353 = scalar_lea.sflag [#allocation7], 1
    %354 = vsyncpa %s353, 1
    %355 = vsyncpa [#allocation5], 1
    %s356 = scalar_lea.sflag [#allocation5], 1
    %357 = vsyncpa %s356, 1

</llo_original>
